<compile_context>
chip_gen: v5e
topology: v5e:2x2
jax: 0.10.0
libtpu: 0.0.40
codegen_flags: <defaults>
</compile_context>

<pallas_src>
import jax
import jax.numpy as jnp
from jax.experimental import pallas as pl
from jax.experimental.pallas import tpu as pltpu


def _lang_embed_kernel(lang_ref, table_ref, o_ref):
    # lang_ref : SMEM (1,) int32 scalar-prefetch ref -- the clamped language id
    # table_ref: (num_languages, e_padded) full embedding table, resident in VMEM
    # o_ref    : (tm, e_padded) output tile for this batch slice
    row = table_ref[pl.ds(lang_ref[0], 1), :]                    # (1, e_padded)
    o_ref[...] = jnp.broadcast_to(row, o_ref.shape).astype(o_ref.dtype)


def _round_up(x, m):
    return ((x + m - 1) // m) * m


def language_embedding(embedding_table, lang_type_id, batch):
    """embedding_table: (num_languages, embedding_size); lang_type_id: scalar id.

    Returns (batch, embedding_size) where every row == embedding_table[lang_type_id].
    """
    num_languages, embedding_size = embedding_table.shape
    dtype = embedding_table.dtype
    dtype_bytes = jnp.dtype(dtype).itemsize

    # Lane-dense output: pad embedding width to a multiple of 128 so output stores
    # are full-lane unmasked vst's; slice back in the wrapper only if we padded.
    e_padded = max(128, _round_up(embedding_size, 128))
    if e_padded != embedding_size:
        embedding_table = jnp.pad(embedding_table,
                                  ((0, 0), (0, e_padded - embedding_size)))

    # ---- generation-aware tile selection (kernel is pure HBM-write-bound) ------
    try:
        vmem_cap = int(pltpu.get_tpu_info().vmem_capacity_bytes)
    except Exception:
        vmem_cap = 64 << 20          # conservative fallback (v7x per-TC VMEM)

    m_aligned = _round_up(max(batch, 1), 8)

    # Target ~4 MiB per output block (amortizes the ~0.35 us/step pipeline
    # overhead), but keep the double-buffered output footprint <= ~1/3 of VMEM.
    target_tile_bytes = 4 << 20
    tm = max(8, (target_tile_bytes // (e_padded * dtype_bytes)) // 8 * 8)
    max_tile_bytes = max(512 << 10, (vmem_cap // 3) // 2)
    tm = min(tm, max(8, (max_tile_bytes // (e_padded * dtype_bytes)) // 8 * 8))
    tm = min(tm, m_aligned)
    # Keep >= 2 grid steps for mid/large batches so v7x can shard the batch axis
    # across both TensorCores (one giant tile pins all writeback on one TC).
    if m_aligned >= 16:
        tm = min(tm, max(8, _round_up((m_aligned + 1) // 2, 8)))

    grid_m = pl.cdiv(batch, tm)

    table_bytes = num_languages * e_padded * dtype_bytes
    tile_bytes = tm * e_padded * dtype_bytes
    vmem_limit = int(min(int(vmem_cap * 0.9),
                         max(32 << 20, table_bytes + 2 * tile_bytes + (4 << 20))))

    # Clamp the id: an OOB index would otherwise read past the table.
    lang = jnp.clip(jnp.asarray([lang_type_id], dtype=jnp.int32),
                    0, num_languages - 1)

    out = pl.pallas_call(
        _lang_embed_kernel,
        out_shape=jax.ShapeDtypeStruct((batch, e_padded), dtype),
        grid_spec=pltpu.PrefetchScalarGridSpec(
            num_scalar_prefetch=1,
            grid=(grid_m,),
            in_specs=[
                # Full tiny table as one block; constant index_map -> DMA'd once,
                # resident across all grid steps (VMEM cost = table_bytes, KBs).
                pl.BlockSpec((num_languages, e_padded), lambda i, lang_ref: (0, 0)),
            ],
            # Lane-dense, sublane-aligned output tiles; ragged final block masked.
            out_specs=pl.BlockSpec((tm, e_padded), lambda i, lang_ref: (i, 0)),
        ),
        compiler_params=pltpu.CompilerParams(
            dimension_semantics=("parallel",),   # batch tiles independent -> megacore
            vmem_limit_bytes=vmem_limit,
        ),
    )(lang, embedding_table)

    if e_padded != embedding_size:
        out = out[:, :embedding_size]
    return out


if __name__ == "__main__":
    # Small shapes consistent with the module: x only contributes its batch dim;
    # the embedding table is (num_languages, embedding_size).
    num_languages, embedding_size = 4, 128
    batch, seq, d_model = 2, 8, 32

    key = jax.random.PRNGKey(0)
    kx, ke = jax.random.split(key, 2)

    x = jax.random.normal(kx, (batch, seq, d_model), dtype=jnp.float32)  # only x.shape[0] used
    emb_table = jax.random.normal(ke, (num_languages, embedding_size), dtype=jnp.float32)
    lang_type_ids = 2  # scalar language id, as in the PyTorch forward

    y = language_embedding(emb_table, lang_type_ids, x.shape[0])
    jax.block_until_ready(y)

    # Reference: every batch row equals the selected embedding row.
    y_ref = jnp.broadcast_to(emb_table[lang_type_ids], (batch, embedding_size))
    assert y.shape == (batch, embedding_size)
    assert jnp.allclose(y, y_ref, atol=0.0, rtol=0.0)

    print("KERNEL_OK")
</pallas_src>

<mosaic_0001>
module attributes {stable_mosaic.version = 11 : i64} {
  func.func @_lang_embed_kernel(%arg0: i32, %arg1: memref<1xi32, #tpu.memory_space<smem>>, %arg2: memref<4x128xf32, #tpu.memory_space<vmem>>, %arg3: memref<8x128xf32, #tpu.memory_space<vmem>>) attributes {dimension_semantics = [#tpu.dimension_semantics<parallel>], iteration_bounds = array<i64: 1>, scalar_prefetch = 1 : i64, scratch_operands = 0 : i64, tpu.core_type = #tpu.core_type<tc>, window_params = [{pipeline_mode = #tpu.pipeline_mode<synchronous>, transform_indices = @transform_0, window_bounds = array<i64: 4, 128>}, {transform_indices = @transform_1, window_bounds = array<i64: 8, 128>}]} {
    %c0 = arith.constant 0 : index
    %0 = memref.load %arg1[%c0] : memref<1xi32, #tpu.memory_space<smem>>
    %1 = arith.index_cast %0 : i32 to index
    %c0_0 = arith.constant 0 : index
    %2 = vector.load %arg2[%1, %c0_0] : memref<4x128xf32, #tpu.memory_space<vmem>>, vector<1x128xf32>
    %3 = vector.shape_cast %2 : vector<1x128xf32> to vector<1x128xf32>
    %4 = vector.broadcast %3 : vector<1x128xf32> to vector<8x128xf32>
    %c0_1 = arith.constant 0 : index
    %c0_2 = arith.constant 0 : index
    %5 = vector.load %arg3[%c0_1, %c0_2] : memref<8x128xf32, #tpu.memory_space<vmem>>, vector<8x128xf32>
    tpu.vector_store %arg3[%c0_1, %c0_2], %4 {strides = array<i32>} : memref<8x128xf32, #tpu.memory_space<vmem>>, vector<8x128xf32>,
    return
  }
  func.func @transform_0(%arg0: i32, %arg1: memref<1xi32, #tpu.memory_space<smem>>) -> (i32, i32) {
    %c0_i32 = arith.constant 0 : i32
    %c0_i32_0 = arith.constant 0 : i32
    %c0_i32_1 = arith.constant 0 : i32
    return %c0_i32, %c0_i32_0 : i32, i32
  }
  func.func @transform_1(%arg0: i32, %arg1: memref<1xi32, #tpu.memory_space<smem>>) -> (i32, i32) {
    %c0_i32 = arith.constant 0 : i32
    %c0_i32_0 = arith.constant 0 : i32
    return %arg0, %c0_i32 : i32, i32
  }
}

</mosaic_0001>

<llo_original>
// kernel: tpu_custom_call.1
$region0: #{tpu_custom_call.1}
  #allocation0 [shape = 'u32[]', space=smem, size = 0x4, offset = 0x4, fixed_abs, tag = 'smem constant byte address 0x4 - core index']
  #allocation1 [shape = 'u32[72,128]{1,0:T(1,128)}', space=vmem, size = 0x9000, scoped, tag = 'internal scratch']
  #allocation2 [shape = 's32[1]{0}', space=sflag, size = 0x4, scoped, tag = 'scoped memory for tpu_custom_call.1']
  #allocation3 [shape = 's32[1]{0:T(128)S(6)}', space=smem, size = 0x200, scoped, tag = 'prefetched SMEM operand 0']
  %s0 = inlined_call_operand.<no memory space> [shape: s32[1], index: 0, kind: input, shape index: {}]
  %s1 = inlined_call_operand.hbm [shape: f32[4,128], index: 1, kind: input, shape index: {}]
  %s2 = inlined_call_operand.hbm [shape: f32[2,128], index: 2, kind: output, shape index: {}]
  %s3 = sld [smem:[#allocation0]]
  $region18: #{tpu_custom_call.1} parent=0
    _
  %s5 = ssub.s32 1, %s3
  %s6 = scalar_select 0, %s5, %s3
  %7 = sst [smem:[#allocation3]] %s0
  $region1: #{tpu_custom_call.1} parent=0
    #allocation4 [shape = 'u8[2048]{0}', space=vmem, size = 0x800, scoped, tag = 'input window, operand 1, single buffered']
    #allocation5 [shape = 's32[1]{0}', space=sflag, size = 0x4, scoped, tag = 'scoped memory for tpu_custom_call.1']
    #allocation6 [shape = 's32[1]{0}', space=sflag, size = 0x4, scoped, tag = 'scoped memory for tpu_custom_call.1']
    #allocation7 [shape = 'u8[4096]{0}', space=vmem, size = 0x1000, scoped, tag = 'output window, operand 0, single buffered']
    %8 = vsyncpa [#allocation5], 0
    %9 = vsyncpa [#allocation6], 0
    // Predicated region
    $region2: #{tpu_custom_call.1} parent=1 // pred_check
      _
    $region3: #{tpu_custom_call.1} parent=1 // pred_check_branch
      %11 = sbr.rel (0) target = $region5
    $region4: #{tpu_custom_call.1} parent=1 // pred_region
      %13 = vsyncadd [#allocation5], 0
      %s15 = sshll.u32 %s1, 4
      %s16 = int_to_ptr.hbm [resolvable:$true] %s15
      %s17 = sshll.u32 [#allocation4], 4
      %s18 = int_to_ptr.vmem [resolvable:$true] %s17
      %20 = dma.hbm_to_vmem [thread:$0]  %s16, 64, %s18, [#allocation5]
    $region5: #{tpu_custom_call.1} parent=1 // pred_fallthru
      _
    // Predicated region
    $region6: #{tpu_custom_call.1} parent=1 // pred_check
      _
    $region7: #{tpu_custom_call.1} parent=1 // pred_check_branch
      %22 = sbr.rel (0) target = $region9
    $region8: #{tpu_custom_call.1} parent=1 // pred_region
      %24 = dma.done [#allocation5], 64
    $region9: #{tpu_custom_call.1} parent=1 // pred_fallthru
      _
    %s25 = sld [smem:[#allocation3]]
    %s26 = scalar_lea.vmem [#allocation4], %s25
    %v27 = vld [vmem:[%s26] sm:$0x1]
    %v28 = vperm.slane %v27, 0
    %29 = vst [vmem:[#allocation7] sm:$0xff] %v28
    // Predicated region
    $region10: #{tpu_custom_call.1} parent=1 // pred_check
      _
    $region11: #{tpu_custom_call.1} parent=1 // pred_check_branch
      %31 = sbr.rel (0) target = $region13
    $region12: #{tpu_custom_call.1} parent=1 // pred_region
      %33 = vsyncadd [#allocation6], 96
      %s34 = sshll.u32 [#allocation7], 4
      %s35 = int_to_ptr.vmem [resolvable:$true] %s34
      %s36 = sshll.u32 %s2, 4
      %s37 = int_to_ptr.hbm [resolvable:$true] %s36
      %42 = dma.vmem_to_hbm [thread:$0]  %s35, 32, %s37, [#allocation6], 32, 32, 2
    $region13: #{tpu_custom_call.1} parent=1 // pred_fallthru
      _
    // Predicated region
    $region14: #{tpu_custom_call.1} parent=1 // pred_check
      _
    $region15: #{tpu_custom_call.1} parent=1 // pred_check_branch
      %44 = sbr.rel (0) target = $region17
    $region16: #{tpu_custom_call.1} parent=1 // pred_region
      %46 = dma.done [#allocation6], 128
    $region17: #{tpu_custom_call.1} parent=1 // pred_fallthru
      _
    %47 = vsyncpa [#allocation5], 1
    %48 = vsyncpa [#allocation6], 1

</llo_original>
